<compile_context>
chip_gen: v5e
topology: v5e:2x2
jax: 0.10.0
libtpu: 0.0.40
codegen_flags: <defaults>
</compile_context>

<pallas_src>
import functools

import jax
import jax.numpy as jnp
from jax.experimental import pallas as pl
from jax.experimental.pallas import tpu as pltpu


def _round_up(x, m):
    return ((x + m - 1) // m) * m


def residual_linear_kernel(x_ref, w_ref, b_ref, o_ref, *, tn, col_axis):
    # x_ref: [TM, Hp] (full hidden, for the matmul)
    # w_ref: [Hp, TN]   b_ref: [1, TN]   o_ref: [TM, TN]
    j = pl.program_id(col_axis)
    col = pl.multiple_of(j * tn, 128)

    fn_x = jnp.dot(x_ref[...], w_ref[...], preferred_element_type=jnp.float32)
    fn_x = fn_x + b_ref[...].astype(jnp.float32)

    # Residual: slice of x matching this output column block (no extra DMA).
    x_res = x_ref[:, pl.ds(col, tn)]
    o_ref[...] = (x_res.astype(jnp.float32) + fn_x).astype(o_ref.dtype)


def residual_forward(
    x,
    w,
    b,
    *,
    tm=512,
    tn_max=1024,
    vmem_budget_bytes=40 * 1024 * 1024,
    alias_input=True,
):
    """Residual(Linear): out = x + (x @ w + b).

    x: [B, S, H]; w: [H, H] stored pre-transposed (y = x @ w + b); b: [H].
    """
    B, S, H = x.shape
    M = B * S
    x2d = x.reshape(M, H)
    itemsize = jnp.dtype(x.dtype).itemsize

    # --- hidden dim: pad only to the 128-lane boundary -----------------------
    hp = _round_up(H, 128)

    # --- rows: pad only to the 8-sublane boundary (ragged last tile is fine) -
    mp = _round_up(M, 8)

    # --- row (M) tile ---------------------------------------------------------
    tm = max(8, _round_up(min(tm, mp), 8))
    # Guarantee >= 2 row tiles so the 'parallel' M axis can shard across v7x's
    # two TensorCores (single-tile M would leave one core idle).
    if pl.cdiv(mp, tm) == 1 and mp >= 16:
        tm = _round_up(pl.cdiv(mp, 2), 8)
    m_tiles = pl.cdiv(mp, tm)

    # --- column (N) tile: fit double-buffered blocks in the VMEM budget ------
    def footprint(tm_, tn_):
        # 2x for double buffering: x[tm,hp] + W[hp,tn] + bias[1,tn] + out[tm,tn]
        return 2 * (tm_ * hp + hp * tn_ + tn_ + tm_ * tn_) * itemsize

    # Candidates: multiples of 128 that divide hp, largest first.  Prefer
    # tn == hp (single column tile -> W DMA'd exactly once), even above tn_max.
    tn_cands = [d * 128 for d in range(hp // 128, 0, -1) if hp % (d * 128) == 0]
    tn = tn_cands[-1]
    for cand in tn_cands:
        if cand != hp and cand > tn_max:
            continue
        if footprint(tm, cand) <= vmem_budget_bytes:
            tn = cand
            break
    # Still over budget at tn == 128: shrink the row tile.
    while footprint(tm, tn) > vmem_budget_bytes and tm > 8:
        tm = max(8, _round_up(tm // 2, 8))
    m_tiles = pl.cdiv(mp, tm)

    assert hp % 128 == 0 and tn % 128 == 0 and hp % tn == 0, (hp, tn)
    n_tiles = hp // tn

    # --- padding (skipped entirely when shapes are already aligned) ----------
    pad_m, pad_h = mp - M, hp - H
    x_pad = x2d if (pad_m == 0 and pad_h == 0) else jnp.pad(
        x2d, ((0, pad_m), (0, pad_h)))
    w_pad = w if pad_h == 0 else jnp.pad(w, ((0, pad_h), (0, pad_h)))
    b_pad = (b if pad_h == 0 else jnp.pad(b, (0, pad_h))).reshape(1, hp)

    # --- grid order: minimize redundant HBM traffic --------------------------
    #   'mn' (m outer, n inner): W re-read per row tile  -> (m_tiles-1)*hp*hp
    #   'nm' (n outer, m inner): x re-read per col tile  -> (n_tiles-1)*mp*hp
    if n_tiles == 1:
        order = "mn"
    else:
        waste_w = (m_tiles - 1) * hp * hp
        waste_x = (n_tiles - 1) * mp * hp
        order = "mn" if waste_w <= waste_x else "nm"

    if order == "mn":
        grid = (m_tiles, n_tiles)
        col_axis = 1
        x_spec = pl.BlockSpec((tm, hp), lambda i, j: (i, 0))
        w_spec = pl.BlockSpec((hp, tn), lambda i, j: (0, j))
        b_spec = pl.BlockSpec((1, tn), lambda i, j: (0, j))
        o_spec = pl.BlockSpec((tm, tn), lambda i, j: (i, j))
        x_reads, w_reads = 1, m_tiles
    else:
        grid = (n_tiles, m_tiles)
        col_axis = 0
        x_spec = pl.BlockSpec((tm, hp), lambda j, i: (i, 0))
        w_spec = pl.BlockSpec((hp, tn), lambda j, i: (0, j))
        b_spec = pl.BlockSpec((1, tn), lambda j, i: (0, j))
        o_spec = pl.BlockSpec((tm, tn), lambda j, i: (i, j))
        x_reads, w_reads = n_tiles, 1

    cost = pl.CostEstimate(
        flops=2 * mp * hp * hp + mp * hp,
        transcendentals=0,
        bytes_accessed=itemsize * (
            x_reads * mp * hp        # x streamed (re-read per col tile in 'nm')
            + w_reads * hp * hp      # W streamed (re-read per row tile in 'mn')
            + hp                     # bias
            + mp * hp                # output writeback
        ),
    )

    # Aliasing x_pad -> out is only enabled with a single column tile; with
    # the swapped ('nm') order the x row blocks are re-read across column
    # tiles, so aliasing would be genuinely unsafe there.
    io_alias = {0: 0} if (alias_input and n_tiles == 1) else {}

    vmem_limit = int(footprint(tm, tn)) + (4 << 20)

    out = pl.pallas_call(
        functools.partial(residual_linear_kernel, tn=tn, col_axis=col_axis),
        out_shape=jax.ShapeDtypeStruct((mp, hp), x.dtype),
        grid_spec=pltpu.PrefetchScalarGridSpec(
            num_scalar_prefetch=0,
            grid=grid,
            in_specs=[x_spec, w_spec, b_spec],
            out_specs=o_spec,
        ),
        compiler_params=pltpu.CompilerParams(
            dimension_semantics=("parallel", "parallel"),
            vmem_limit_bytes=vmem_limit,
        ),
        cost_estimate=cost,
        input_output_aliases=io_alias,
    )(x_pad, w_pad, b_pad)

    return out[:M, :H].reshape(B, S, H)


def _reference(x, w, b):
    return x + (jnp.einsum("bsh,hk->bsk", x, w) + b)


def _check(x, w, b, **kwargs):
    out = jax.block_until_ready(residual_forward(x, w, b, **kwargs))
    ref = _reference(x, w, b)
    assert out.shape == x.shape
    assert jnp.allclose(out, ref, atol=1e-4, rtol=1e-4)


if __name__ == "__main__":
    key = jax.random.PRNGKey(0)

    # --- demo shapes consistent with the module: batch=2, seq=8, hidden=32 ----
    # (single column tile, >=2 row tiles so both v7x cores get work,
    #  input aliased onto the output)
    B, S, H = 2, 8, 32
    kx, kw, kb = jax.random.split(key, 3)
    x = jax.random.normal(kx, (B, S, H), dtype=jnp.float32)
    w = jax.random.normal(kw, (H, H), dtype=jnp.float32) * 0.02
    b = jax.random.normal(kb, (H,), dtype=jnp.float32) * 0.02
    _check(x, w, b)

    # --- multi-tile path: several row tiles, 2 column tiles, ragged last row
    # tile (M=200 not a multiple of tm), swapped 'nm' grid order (x resident) -
    B2, S2, H2 = 4, 50, 160
    kx2, kw2, kb2 = jax.random.split(jax.random.PRNGKey(1), 3)
    x2 = jax.random.normal(kx2, (B2, S2, H2), dtype=jnp.float32)
    w2 = jax.random.normal(kw2, (H2, H2), dtype=jnp.float32) * 0.02
    b2 = jax.random.normal(kb2, (H2,), dtype=jnp.float32) * 0.02
    _check(x2, w2, b2, tm=64, tn_max=128, vmem_budget_bytes=600_000)

    # --- multi-tile path where M >> H: 'mn' grid order (W streamed) ----------
    B3, S3, H3 = 8, 128, 160
    kx3, kw3, kb3 = jax.random.split(jax.random.PRNGKey(2), 3)
    x3 = jax.random.normal(kx3, (B3, S3, H3), dtype=jnp.float32)
    w3 = jax.random.normal(kw3, (H3, H3), dtype=jnp.float32) * 0.02
    b3 = jax.random.normal(kb3, (H3,), dtype=jnp.float32) * 0.02
    _check(x3, w3, b3, tm=512, tn_max=128, vmem_budget_bytes=2_000_000)

    print("KERNEL_OK")
</pallas_src>

<mosaic_0001>
module attributes {stable_mosaic.version = 11 : i64} {
  func.func @residual_linear_kernel(%arg0: i32, %arg1: i32, %arg2: memref<8x128xf32, #tpu.memory_space<vmem>>, %arg3: memref<128x128xf32, #tpu.memory_space<vmem>>, %arg4: memref<1x128xf32, #tpu.memory_space<vmem>>, %arg5: memref<8x128xf32, #tpu.memory_space<vmem>>) attributes {dimension_semantics = [#tpu.dimension_semantics<parallel>, #tpu.dimension_semantics<parallel>], iteration_bounds = array<i64: 2, 1>, scalar_prefetch = 0 : i64, scratch_operands = 0 : i64, tpu.core_type = #tpu.core_type<tc>, window_params = [{transform_indices = @transform_0, window_bounds = array<i64: 8, 128>}, {transform_indices = @transform_1, window_bounds = array<i64: 128, 128>}, {transform_indices = @transform_2, window_bounds = array<i64: 1, 128>}, {transform_indices = @transform_3, window_bounds = array<i64: 8, 128>}]} {
    %c128_i32 = arith.constant 128 : i32
    %0 = arith.muli %arg1, %c128_i32 : i32
    %1 = tpu.assume_multiple %0, 128 : i32
    %c0 = arith.constant 0 : index
    %c0_0 = arith.constant 0 : index
    %2 = vector.load %arg2[%c0, %c0_0] : memref<8x128xf32, #tpu.memory_space<vmem>>, vector<8x128xf32>
    %c0_1 = arith.constant 0 : index
    %c0_2 = arith.constant 0 : index
    %3 = vector.load %arg3[%c0_1, %c0_2] : memref<128x128xf32, #tpu.memory_space<vmem>>, vector<128x128xf32>
    %cst = arith.constant dense<0.000000e+00> : vector<8x128xf32>
    %4 = tpu.matmul %2, %3, %cst {dimension_numbers = #tpu.dot_dimension_numbers<[1], [0], [0], [1], [0, 0, 1, 1], [], []>} : vector<8x128xf32>, vector<128x128xf32>, vector<8x128xf32> -> vector<8x128xf32>
    %c0_3 = arith.constant 0 : index
    %c0_4 = arith.constant 0 : index
    %5 = vector.load %arg4[%c0_3, %c0_4] : memref<1x128xf32, #tpu.memory_space<vmem>>, vector<1x128xf32>
    %6 = vector.broadcast %5 : vector<1x128xf32> to vector<8x128xf32>
    %7 = arith.addf %4, %6 : vector<8x128xf32>
    %c0_5 = arith.constant 0 : index
    %8 = arith.index_cast %1 : i32 to index
    %9 = vector.load %arg2[%c0_5, %8] : memref<8x128xf32, #tpu.memory_space<vmem>>, vector<8x128xf32>
    %10 = arith.addf %9, %7 : vector<8x128xf32>
    %c0_6 = arith.constant 0 : index
    %c0_7 = arith.constant 0 : index
    %11 = vector.load %arg5[%c0_6, %c0_7] : memref<8x128xf32, #tpu.memory_space<vmem>>, vector<8x128xf32>
    tpu.vector_store %arg5[%c0_6, %c0_7], %10 {strides = array<i32>} : memref<8x128xf32, #tpu.memory_space<vmem>>, vector<8x128xf32>,
    return
  }
  func.func @transform_0(%arg0: i32, %arg1: i32) -> (i32, i32) {
    %c0_i32 = arith.constant 0 : i32
    %c0_i32_0 = arith.constant 0 : i32
    return %arg0, %c0_i32 : i32, i32
  }
  func.func @transform_1(%arg0: i32, %arg1: i32) -> (i32, i32) {
    %c0_i32 = arith.constant 0 : i32
    %c0_i32_0 = arith.constant 0 : i32
    return %c0_i32, %arg1 : i32, i32
  }
  func.func @transform_2(%arg0: i32, %arg1: i32) -> (i32, i32) {
    %c0_i32 = arith.constant 0 : i32
    %c0_i32_0 = arith.constant 0 : i32
    return %c0_i32, %arg1 : i32, i32
  }
  func.func @transform_3(%arg0: i32, %arg1: i32) -> (i32, i32) {
    %c0_i32 = arith.constant 0 : i32
    return %arg0, %arg1 : i32, i32
  }
}

</mosaic_0001>

<llo_original>
// kernel: tpu_custom_call.1
$region0: #{tpu_custom_call.1}
  #allocation0 [shape = 'u32[]', space=smem, size = 0x4, offset = 0x4, fixed_abs, tag = 'smem constant byte address 0x4 - core index']
  #allocation1 [shape = 'u32[72,128]{1,0:T(1,128)}', space=vmem, size = 0x9000, scoped, tag = 'internal scratch']
  %s0 = inlined_call_operand.hbm [shape: f32[16,128], index: 0, kind: input, shape index: {}, may-alias: {0,3}]
  %s1 = inlined_call_operand.hbm [shape: f32[128,128], index: 1, kind: input, shape index: {}]
  %s2 = inlined_call_operand.vmem [shape: f32[1,128], index: 2, kind: input, shape index: {}]
  %s3 = inlined_call_operand.hbm [shape: f32[16,128], index: 3, kind: output, shape index: {}, may-alias: {0,3}]
  %s4 = sld [smem:[#allocation0]]
  $region53: #{tpu_custom_call.1} parent=0
    _
  %s6 = ssub.s32 1, %s4
  %s7 = scalar_select 0, %s6, %s4
  $region1: #{tpu_custom_call.1} parent=0
    #allocation2 [shape = 'u8[8192]{0}', space=vmem, size = 0x2000, scoped, tag = 'input window, operand 0']
    #allocation3 [shape = 's32[2]{0}', space=sflag, size = 0x8, scoped, tag = 'scoped memory for tpu_custom_call.1']
    #allocation4 [shape = 's32[2]{0}', space=sflag, size = 0x8, scoped, tag = 'scoped memory for tpu_custom_call.1']
    #allocation5 [shape = 'u8[65536]{0}', space=vmem, size = 0x10000, scoped, tag = 'input window, operand 1, single buffered']
    #allocation6 [shape = 's32[1]{0}', space=sflag, size = 0x4, scoped, tag = 'scoped memory for tpu_custom_call.1']
    #allocation7 [shape = 'u8[8192]{0}', space=vmem, size = 0x2000, scoped, tag = 'output window, operand 0']
    %8 = vsyncpa [#allocation3], 0
    %s9 = scalar_lea.sflag [#allocation3], 1
    %10 = vsyncpa %s9, 0
    %11 = vsyncpa [#allocation6], 0
    %12 = vsyncpa [#allocation4], 0
    %s13 = scalar_lea.sflag [#allocation4], 1
    %14 = vsyncpa %s13, 0
    loop: start=0, step=1, limit=4
    $region2: #{tpu_custom_call.1} parent=1 // loop_pre_header
      _
    $region3: #{tpu_custom_call.1} parent=1 // loop_header
      %s16 = sphi 0, %s20
      %p17 = scmp.ge.s32.totalorder %s16, 4
      %s23 = sphi 0, %s35
      %s24 = sphi 0, %s31
      %s25 = sphi 0, %s23
      %s26 = sphi 0, %s24
      %s27 = sphi 0, %s25
      %s28 = sphi 0, %s26
      %s38 = sphi 0, %s40
      %s41 = sphi 0, %s38
      %s42 = sphi 0, %s41
      %s58 = sphi 0, %s42
      %s64 = sphi 0, %s66
      %s67 = sphi 0, %s64
      %s68 = sphi 0, %s67
      %s84 = sphi 0, %s68
      %s90 = sphi 0, %s92
      %s93 = sphi 0, %s90
      %s94 = sphi 0, %s93
      %s110 = sphi 0, %s94
      %s118 = sphi 0, %s120
      %s121 = sphi 0, %s118
      %s122 = sphi 0, %s121
      %s138 = sphi 0, %s122
    $region4: #{tpu_custom_call.1} parent=1 // loop_header_branch
      %19 = sbr.rel (%p17) target = $region8
    $region5: #{tpu_custom_call.1} parent=1 // loop_body
      %s21 = ssub.s32 %s16, 1
      %s22 = ssub.s32 %s16, 2
      %s29 = sadd.s32 1, %s24
      %p30 = scmp.ge.s32.totalorder %s29, 1
      %s31 = scalar_select %p30, 0, %s29
      %s32 = sadd.s32 1, %s23
      %s33 = scalar_select %p30, %s32, %s23
      %p34 = scmp.ge.s32.totalorder %s33, 2
      %s35 = scalar_select %p34, 0, %s33
      %s36 = ssub.s32 %s23, %s35
      %p37 = scmp.eq.s32.totalorder %s36, 0
      %s39 = sadd.s32 %s38, 1
      %s40 = scalar_select %p37, %s38, %s39
      %p43 = pneg %p37
      %p44 = scmp.eq.s32.totalorder %s16, 1
      %p45 = por %p43, %p44
      %p46 = scmp.ne.s32.totalorder %s38, %s41
      %p47 = scmp.eq.s32.totalorder %s16, 0
      %p48 = por %p46, %p47
      %p49 = scmp.ne.s32.totalorder %s38, %s41
      %p50 = scmp.eq.s32.totalorder %s21, 1
      %p51 = por %p49, %p50
      %p52 = scmp.ne.s32.totalorder %s41, %s42
      %p53 = scmp.eq.s32.totalorder %s21, 0
      %p54 = por %p52, %p53
      %p55 = scmp.ne.s32.totalorder %s41, %s42
      %p56 = scmp.eq.s32.totalorder %s22, 1
      %p57 = por %p55, %p56
      %p59 = scmp.ne.s32.totalorder %s42, %s58
      %p60 = scmp.eq.s32.totalorder %s22, 0
      %p61 = por %p59, %p60
      %s62 = ssub.s32 %s24, %s31
      %p63 = scmp.eq.s32.totalorder %s62, 0
      %s65 = sadd.s32 %s64, 1
      %s66 = scalar_select %p63, %s64, %s65
      %p69 = pneg %p63
      %p70 = scmp.eq.s32.totalorder %s16, 1
      %p71 = por %p69, %p70
      %p72 = scmp.ne.s32.totalorder %s64, %s67
      %p73 = scmp.eq.s32.totalorder %s16, 0
      %p74 = por %p72, %p73
      %p75 = scmp.ne.s32.totalorder %s64, %s67
      %p76 = scmp.eq.s32.totalorder %s21, 1
      %p77 = por %p75, %p76
      %p78 = scmp.ne.s32.totalorder %s67, %s68
      %p79 = scmp.eq.s32.totalorder %s21, 0
      %p80 = por %p78, %p79
      %p81 = scmp.ne.s32.totalorder %s67, %s68
      %p82 = scmp.eq.s32.totalorder %s22, 1
      %p83 = por %p81, %p82
      %p85 = scmp.ne.s32.totalorder %s68, %s84
      %p86 = scmp.eq.s32.totalorder %s22, 0
      %p87 = por %p85, %p86
      %s88 = ssub.s32 %s24, %s31
      %p89 = scmp.eq.s32.totalorder %s88, 0
      %s91 = sadd.s32 %s90, 1
      %s92 = scalar_select %p89, %s90, %s91
      %p95 = pneg %p89
      %p96 = scmp.eq.s32.totalorder %s16, 1
      %p97 = por %p95, %p96
      %p98 = scmp.ne.s32.totalorder %s90, %s93
      %p99 = scmp.eq.s32.totalorder %s16, 0
      %p100 = por %p98, %p99
      %p101 = scmp.ne.s32.totalorder %s90, %s93
      %p102 = scmp.eq.s32.totalorder %s21, 1
      %p103 = por %p101, %p102
      %p104 = scmp.ne.s32.totalorder %s93, %s94
      %p105 = scmp.eq.s32.totalorder %s21, 0
      %p106 = por %p104, %p105
      %p107 = scmp.ne.s32.totalorder %s93, %s94
      %p108 = scmp.eq.s32.totalorder %s22, 1
      %p109 = por %p107, %p108
      %p111 = scmp.ne.s32.totalorder %s94, %s110
      %p112 = scmp.eq.s32.totalorder %s22, 0
      %p113 = por %p111, %p112
      %s114 = ssub.s32 %s23, %s35
      %s115 = ssub.s32 %s24, %s31
      %s116 = sor.u32 %s114, %s115
      %p117 = scmp.eq.s32.totalorder %s116, 0
      %s119 = sadd.s32 %s118, 1
      %s120 = scalar_select %p117, %s118, %s119
      %p123 = pneg %p117
      %p124 = scmp.eq.s32.totalorder %s16, 1
      %p125 = por %p123, %p124
      %p126 = scmp.ne.s32.totalorder %s118, %s121
      %p127 = scmp.eq.s32.totalorder %s16, 0
      %p128 = por %p126, %p127
      %p129 = scmp.ne.s32.totalorder %s118, %s121
      %p130 = scmp.eq.s32.totalorder %s21, 1
      %p131 = por %p129, %p130
      %p132 = scmp.ne.s32.totalorder %s121, %s122
      %p133 = scmp.eq.s32.totalorder %s21, 0
      %p134 = por %p132, %p133
      %p135 = scmp.ne.s32.totalorder %s121, %s122
      %p136 = scmp.eq.s32.totalorder %s22, 1
      %p137 = por %p135, %p136
      %p139 = scmp.ne.s32.totalorder %s122, %s138
      %p140 = scmp.eq.s32.totalorder %s22, 0
      %p141 = por %p139, %p140
      %p142 = scmp.le.s32.totalorder 1, %s16
      %p143 = scmp.lt.s32.totalorder %s16, 3
      %p144 = pnand %p142, %p143
      %p145 = pneg %p144
      // Predicated region
      $region9: #{tpu_custom_call.1} parent=5 // pred_check
        _
      $region10: #{tpu_custom_call.1} parent=5 // pred_check_branch
        %147 = sbr.rel (%p144) target = $region12
      $region11: #{tpu_custom_call.1} parent=5 // pred_region
        %s148 = ssub.s32 %s16, 1
        // Predicated region
        $region13: #{tpu_custom_call.1} parent=11 // pred_check
          %p149 = pneg %p80
        $region14: #{tpu_custom_call.1} parent=11 // pred_check_branch
          %151 = sbr.rel (%p149) target = $region16
        $region15: #{tpu_custom_call.1} parent=11 // pred_region
          %153 = vsyncadd [#allocation6], 0
          %s154 = smul.addr %s26, 8
          %s155 = scalar_lea.hbm %s1, %s154
          %s156 = sshll.u32 %s155, 4
          %s157 = int_to_ptr.hbm [resolvable:$true] %s156
          %s158 = sshll.u32 [#allocation5], 4
          %s159 = int_to_ptr.vmem [resolvable:$true] %s158
          %164 = dma.hbm_to_vmem [thread:$0]  %s157, 2048, %s159, [#allocation6], 128, 128, 8
        $region16: #{tpu_custom_call.1} parent=11 // pred_fallthru
          _
        // Predicated region
        $region17: #{tpu_custom_call.1} parent=11 // pred_check
          %p165 = pneg %p106
        $region18: #{tpu_custom_call.1} parent=11 // pred_check_branch
          %167 = sbr.rel (%p165) target = $region20
        $region19: #{tpu_custom_call.1} parent=11 // pred_region
          %p168 = scmp.lt.s32.totalorder %s26, 0
          %s169 = scalar_select %p168, %s26, 0
          %s170 = scalar_lea.vmem %s2, %s169
        $region20: #{tpu_custom_call.1} parent=11 // pred_fallthru
          _
      $region12: #{tpu_custom_call.1} parent=5 // pred_fallthru
        _
      %p171 = scmp.lt.s32.totalorder %s16, 2
      // Predicated region
      $region21: #{tpu_custom_call.1} parent=5 // pred_check
        %p172 = pneg %p171
      $region22: #{tpu_custom_call.1} parent=5 // pred_check_branch
        %174 = sbr.rel (%p172) target = $region24
      $region23: #{tpu_custom_call.1} parent=5 // pred_region
        // Predicated region
        $region25: #{tpu_custom_call.1} parent=23 // pred_check
          %p175 = pneg %p48
        $region26: #{tpu_custom_call.1} parent=23 // pred_check_branch
          %177 = sbr.rel (%p175) target = $region28
        $region27: #{tpu_custom_call.1} parent=23 // pred_region
          %s178 = sand.u32 %s38, 1
          %s179 = scalar_lea.sflag [#allocation3], %s178
          %s180 = sand.u32 %s38, 1
          %s181 = smul.addr %s180, 8
          %s182 = scalar_lea.vmem [#allocation2], %s181
          %184 = vsyncadd %s179, 0
          %s185 = smul.addr %s23, 8
          %s186 = scalar_lea.hbm %s0, %s185
          %s188 = sshll.u32 %s186, 4
          %s189 = int_to_ptr.hbm [resolvable:$true] %s188
          %s190 = sshll.u32 %s182, 4
          %s191 = int_to_ptr.vmem [resolvable:$true] %s190
          %193 = dma.hbm_to_vmem [thread:$0]  %s189, 128, %s191, %s179
        $region28: #{tpu_custom_call.1} parent=23 // pred_fallthru
          _
      $region24: #{tpu_custom_call.1} parent=5 // pred_fallthru
        _
      %p194 = scmp.le.s32.totalorder 1, %s16
      %p195 = scmp.lt.s32.totalorder %s16, 3
      %p196 = pnand %p194, %p195
      %p197 = pneg %p196
      // Predicated region
      $region29: #{tpu_custom_call.1} parent=5 // pred_check
        _
      $region30: #{tpu_custom_call.1} parent=5 // pred_check_branch
        %199 = sbr.rel (%p196) target = $region32
      $region31: #{tpu_custom_call.1} parent=5 // pred_region
        %s200 = ssub.s32 %s16, 1
        %s201 = sand.u32 %s41, 1
        %s202 = scalar_lea.sflag [#allocation3], %s201
        %s203 = sand.u32 %s41, 1
        %s204 = smul.addr %s203, 8
        %s205 = scalar_lea.vmem [#allocation2], %s204
        // Predicated region
        $region33: #{tpu_custom_call.1} parent=31 // pred_check
          %p206 = pneg %p54
        $region34: #{tpu_custom_call.1} parent=31 // pred_check_branch
          %208 = sbr.rel (%p206) target = $region36
        $region35: #{tpu_custom_call.1} parent=31 // pred_region
          %210 = dma.done %s202, 128
        $region36: #{tpu_custom_call.1} parent=31 // pred_fallthru
          _
        // Predicated region
        $region37: #{tpu_custom_call.1} parent=31 // pred_check
          %p211 = pneg %p80
        $region38: #{tpu_custom_call.1} parent=31 // pred_check_branch
          %213 = sbr.rel (%p211) target = $region40
        $region39: #{tpu_custom_call.1} parent=31 // pred_region
          %215 = dma.done [#allocation6], 2048
        $region40: #{tpu_custom_call.1} parent=31 // pred_fallthru
          _
        %s216 = sand.u32 %s41, 1
        %s217 = scalar_lea.sflag [#allocation3], %s216
        %s218 = sand.u32 %s41, 1
        %s219 = smul.addr %s218, 8
        %s220 = scalar_lea.vmem [#allocation2], %s219
        %p221 = pneg %p54
        %p222 = pneg %p51
        %p223 = pneg %p80
        %p224 = pneg %p77
        %p225 = scmp.lt.s32.totalorder %s26, 0
        %s226 = scalar_select %p225, %s26, 0
        %s227 = scalar_lea.vmem %s2, %s226
        %p228 = pneg %p106
        %p229 = pneg %p103
        %p230 = pneg %p134
        %p231 = pneg %p131
        %s232 = sand.u32 %s121, 1
        %s233 = scalar_lea.sflag [#allocation4], %s232
        %s234 = sand.u32 %s121, 1
        %s235 = smul.addr %s234, 8
        %s236 = scalar_lea.vmem [#allocation7], %s235
        %p237 = scmp.lt.s32.totalorder %s26, 0
        %s238 = scalar_select %p237, %s26, 0
        %s239 = scalar_lea.vmem %s2, %s238
        %s240 = smul.u32 %s26, 128
        %v241 = vld [vmem:[%s205] sm:$0xff]
        %v242 = vld [vmem:[#allocation5] sm:$0xff]
        %v243 = vld [vmem:[#allocation5 + $0x8] sm:$0xff]
        %v244 = vld [vmem:[#allocation5 + $0x10] sm:$0xff]
        %v245 = vld [vmem:[#allocation5 + $0x18] sm:$0xff]
        %v246 = vld [vmem:[#allocation5 + $0x20] sm:$0xff]
        %v247 = vld [vmem:[#allocation5 + $0x28] sm:$0xff]
        %v248 = vld [vmem:[#allocation5 + $0x30] sm:$0xff]
        %v249 = vld [vmem:[#allocation5 + $0x38] sm:$0xff]
        %v250 = vld [vmem:[#allocation5 + $0x40] sm:$0xff]
        %v251 = vld [vmem:[#allocation5 + $0x48] sm:$0xff]
        %v252 = vld [vmem:[#allocation5 + $0x50] sm:$0xff]
        %v253 = vld [vmem:[#allocation5 + $0x58] sm:$0xff]
        %v254 = vld [vmem:[#allocation5 + $0x60] sm:$0xff]
        %v255 = vld [vmem:[#allocation5 + $0x68] sm:$0xff]
        %v256 = vld [vmem:[#allocation5 + $0x70] sm:$0xff]
        %v257 = vld [vmem:[#allocation5 + $0x78] sm:$0xff]
        %v258 = vld [vmem:[%s239] sm:$0x1]
        %v260 = vperm.slane %v258, 0
        %262 = vmatpush.msra.mxu0 %v257
        %263 = vmatpush.msra.mxu0 %v256
        %264 = vmatpush.msra.mxu0 %v255
        %265 = vmatpush.msra.mxu0 %v254
        %266 = vmatpush.msra.mxu0 %v253
        %267 = vmatpush.msra.mxu0 %v252
        %268 = vmatpush.msra.mxu0 %v251
        %269 = vmatpush.msra.mxu0 %v250
        %270 = vmatpush.msra.mxu0 %v249
        %271 = vmatpush.msra.mxu0 %v248
        %272 = vmatpush.msra.mxu0 %v247
        %273 = vmatpush.msra.mxu0 %v246
        %274 = vmatpush.msra.mxu0 %v245
        %275 = vmatpush.msra.mxu0 %v244
        %276 = vmatpush.msra.mxu0 %v243
        %277 = vmatpush.msra.mxu0 %v242
        %278 = vmatmul.f32.gmra.mxu0 %v241
        %v279 = vpop.f32.mrf.mxu0
        %v280 = vadd.f32 %v260, %v279
        %281 = vdwg.mxu0
        %s282 = sshra.s32 %s240, 7
        %s283 = sand.u32 %s240, 127
        %s284 = scalar_lea.vmem %s205, %s282 [#allocation2]
        %v285 = vld [vmem:[%s284] sm:$0xff]
        %v286 = vadd.f32 %v285, %v280
        %287 = vst [vmem:[%s236] sm:$0xff] %v286
        %s288 = sand.u32 %s121, 1
        %s289 = scalar_lea.sflag [#allocation4], %s288
        %s290 = sand.u32 %s121, 1
        %s291 = smul.addr %s290, 8
        %s292 = scalar_lea.vmem [#allocation7], %s291
        // Predicated region
        $region41: #{tpu_custom_call.1} parent=31 // pred_check
          %p293 = pneg %p131
        $region42: #{tpu_custom_call.1} parent=31 // pred_check_branch
          %295 = sbr.rel (%p293) target = $region44
        $region43: #{tpu_custom_call.1} parent=31 // pred_region
          %297 = vsyncadd %s289, 0
          %s298 = sadd.s32 %s26, %s25
          %s299 = smul.addr %s298, 8
          %s300 = scalar_lea.hbm %s3, %s299
          %s302 = sshll.u32 %s292, 4
          %s303 = int_to_ptr.vmem [resolvable:$true] %s302
          %s304 = sshll.u32 %s300, 4
          %s305 = int_to_ptr.hbm [resolvable:$true] %s304
          %307 = dma.vmem_to_hbm [thread:$0]  %s303, 128, %s305, %s289
        $region44: #{tpu_custom_call.1} parent=31 // pred_fallthru
          _
      $region32: #{tpu_custom_call.1} parent=5 // pred_fallthru
        _
      %p308 = scmp.le.s32.totalorder 2, %s16
      // Predicated region
      $region45: #{tpu_custom_call.1} parent=5 // pred_check
        %p309 = pneg %p308
      $region46: #{tpu_custom_call.1} parent=5 // pred_check_branch
        %311 = sbr.rel (%p309) target = $region48
      $region47: #{tpu_custom_call.1} parent=5 // pred_region
        %s312 = ssub.s32 %s16, 2
        // Predicated region
        $region49: #{tpu_custom_call.1} parent=47 // pred_check
          %p313 = pneg %p137
        $region50: #{tpu_custom_call.1} parent=47 // pred_check_branch
          %315 = sbr.rel (%p313) target = $region52
        $region51: #{tpu_custom_call.1} parent=47 // pred_region
          %s316 = sand.u32 %s122, 1
          %s317 = scalar_lea.sflag [#allocation4], %s316
          %s318 = sand.u32 %s122, 1
          %s319 = smul.addr %s318, 8
          %s320 = scalar_lea.vmem [#allocation7], %s319
          %322 = dma.done %s317, 128
        $region52: #{tpu_custom_call.1} parent=47 // pred_fallthru
          _
      $region48: #{tpu_custom_call.1} parent=5 // pred_fallthru
        _
    $region6: #{tpu_custom_call.1} parent=1 // loop_footer
      %s20 = sadd.s32 1, %s16
    $region7: #{tpu_custom_call.1} parent=1 // loop_footer_branch
      %15 = sbr.rel target = $region3
    $region8: #{tpu_custom_call.1} parent=1 // loop_exit
      _
    %323 = vsyncpa [#allocation3], 1
    %s324 = scalar_lea.sflag [#allocation3], 1
    %325 = vsyncpa %s324, 1
    %326 = vsyncpa [#allocation6], 1
    %327 = vsyncpa [#allocation4], 1
    %s328 = scalar_lea.sflag [#allocation4], 1
    %329 = vsyncpa %s328, 1

</llo_original>
